<compile_context>
chip_gen: v7x
topology: tpu7x:2x2x1
jax: 0.10.0
libtpu: 0.0.40
codegen_flags: <defaults>
</compile_context>

<pallas_src>
import jax
import jax.numpy as jnp
from jax.experimental import pallas as pl
from jax.experimental.pallas import tpu as pltpu  # noqa: F401  (TPU backend)


_LANE = 128  # TPU lane width


def _make_softmax_kernel(n: int, lanes: int):
    """Softmax over the first `n` lanes of a (1, lanes) VMEM tile."""

    def kernel(x_ref, o_ref):
        # x_ref / o_ref: (1, lanes) tiles.  Lanes >= n come from the partial
        # boundary block and hold unspecified data -> mask them to -inf.
        x = x_ref[...].astype(jnp.float32)  # keep f32 math (v5e fast path)
        lane_idx = jax.lax.broadcasted_iota(jnp.int32, (1, lanes), 1)
        x = jnp.where(lane_idx < n, x, -jnp.inf)

        m = jnp.max(x, axis=-1, keepdims=True)      # pad lanes never win
        e = jnp.exp(x - m)                          # exp(-inf) = 0 on pad lanes
        s = jnp.sum(e, axis=-1, keepdims=True)
        o_ref[...] = (e / s).astype(o_ref.dtype)    # exact division

    return kernel


def _loss_scaler_fwd_impl(loss_coefficients: jax.Array) -> jax.Array:
    (n,) = loss_coefficients.shape
    lanes = max(_LANE, pl.cdiv(n, _LANE) * _LANE)
    x2d = loss_coefficients.reshape(1, n)           # metadata-only reshape

    itemsize = jnp.dtype(loss_coefficients.dtype).itemsize
    cost = pl.CostEstimate(
        flops=6 * lanes,            # mask/sub/exp-adjacent VPU work, ~one vreg
        transcendentals=lanes,      # one exp per lane
        bytes_accessed=2 * n * itemsize,
    )

    out2d = pl.pallas_call(
        _make_softmax_kernel(n, lanes),
        out_shape=jax.ShapeDtypeStruct((1, n), loss_coefficients.dtype),
        grid=(1,),
        in_specs=[pl.BlockSpec((1, lanes), lambda i: (0, 0))],
        out_specs=pl.BlockSpec((1, lanes), lambda i: (0, 0)),
        cost_estimate=cost,
    )(x2d)

    return out2d[0]                                  # (n,), metadata-only squeeze


@jax.custom_vjp
def loss_scaler_forward(loss_coefficients: jax.Array) -> jax.Array:
    """Equivalent of LossScaler.forward(): softmax over dim 0 of a 1-D param."""
    return _loss_scaler_fwd_impl(loss_coefficients)


def _loss_scaler_vjp_fwd(loss_coefficients):
    y = _loss_scaler_fwd_impl(loss_coefficients)
    return y, y


def _loss_scaler_vjp_bwd(y, g):
    # d softmax: y * (g - sum(g * y))
    return (y * (g - jnp.sum(g * y)),)


loss_scaler_forward.defvjp(_loss_scaler_vjp_fwd, _loss_scaler_vjp_bwd)


if __name__ == "__main__":
    # Deterministic "torch.randn(num_scalars)" equivalent.
    num_scalars = 8
    key = jax.random.PRNGKey(0)
    loss_coefficients = jax.random.normal(key, (num_scalars,), dtype=jnp.float32)

    out = loss_scaler_forward(loss_coefficients)
    out = jax.block_until_ready(out)

    # Forward check against plain-JAX softmax (exact division -> tight tols).
    ref = jax.nn.softmax(loss_coefficients, axis=0)
    assert out.shape == (num_scalars,)
    assert jnp.allclose(out, ref, atol=1e-6, rtol=1e-6)
    assert jnp.allclose(jnp.sum(out), 1.0, atol=1e-6)

    # Gradient check (the parameter is learnable): custom_vjp vs jax.nn.softmax.
    w = jax.random.normal(jax.random.PRNGKey(1), (num_scalars,), dtype=jnp.float32)
    g_kernel = jax.grad(lambda p: jnp.sum(loss_scaler_forward(p) * w))(loss_coefficients)
    g_ref = jax.grad(lambda p: jnp.sum(jax.nn.softmax(p, axis=0) * w))(loss_coefficients)
    g_kernel = jax.block_until_ready(g_kernel)
    assert jnp.allclose(g_kernel, g_ref, atol=1e-5, rtol=1e-5)

    print("KERNEL_OK")
</pallas_src>

<mosaic_0001>
module attributes {stable_mosaic.version = 11 : i64} {
  func.func @kernel(%arg0: i32, %arg1: memref<1x128xf32, #tpu.memory_space<vmem>>, %arg2: memref<1x128xf32, #tpu.memory_space<vmem>>) attributes {dimension_semantics = [#tpu.dimension_semantics<arbitrary>], iteration_bounds = array<i64: 1>, scalar_prefetch = 0 : i64, scratch_operands = 0 : i64, tpu.core_type = #tpu.core_type<tc>, window_params = [{transform_indices = @transform_0, window_bounds = array<i64: 1, 128>}, {transform_indices = @transform_1, window_bounds = array<i64: 1, 128>}]} {
    %c0 = arith.constant 0 : index
    %c0_0 = arith.constant 0 : index
    %0 = vector.load %arg1[%c0, %c0_0] : memref<1x128xf32, #tpu.memory_space<vmem>>, vector<1x128xf32>
    %1 = tpu.iota {dimensions = array<i32: 1>} : vector<1x128xi32>
    %c8_i32 = arith.constant 8 : i32
    %2 = vector.broadcast %c8_i32 : i32 to vector<1x128xi32>
    %3 = arith.cmpi slt, %1, %2 : vector<1x128xi32>
    %cst = arith.constant 0xFF800000 : f32
    %4 = vector.broadcast %cst : f32 to vector<1x128xf32>
    %5 = arith.select %3, %0, %4 : vector<1x128xi1>, vector<1x128xf32>
    %cst_1 = arith.constant dense<0xFF800000> : vector<1xf32>
    %6 = vector.multi_reduction <maximumf>, %5, %cst_1 [1] : vector<1x128xf32> to vector<1xf32>
    %7 = vector.shape_cast %6 : vector<1xf32> to vector<1x1xf32>
    %8 = vector.broadcast %7 : vector<1x1xf32> to vector<1x128xf32>
    %9 = arith.subf %5, %8 : vector<1x128xf32>
    %10 = math.exp %9 : vector<1x128xf32>
    %cst_2 = arith.constant dense<0.000000e+00> : vector<1xf32>
    %11 = vector.multi_reduction <add>, %10, %cst_2 [1] : vector<1x128xf32> to vector<1xf32>
    %12 = vector.shape_cast %11 : vector<1xf32> to vector<1x1xf32>
    %13 = vector.broadcast %12 : vector<1x1xf32> to vector<1x128xf32>
    %14 = arith.divf %10, %13 : vector<1x128xf32>
    %c0_3 = arith.constant 0 : index
    %c0_4 = arith.constant 0 : index
    %15 = vector.load %arg2[%c0_3, %c0_4] : memref<1x128xf32, #tpu.memory_space<vmem>>, vector<1x128xf32>
    tpu.vector_store %arg2[%c0_3, %c0_4], %14 {strides = array<i32>} : memref<1x128xf32, #tpu.memory_space<vmem>>, vector<1x128xf32>,
    return
  }
  func.func @transform_0(%arg0: i32) -> (i32, i32) {
    %c0_i32 = arith.constant 0 : i32
    %c0_i32_0 = arith.constant 0 : i32
    %c0_i32_1 = arith.constant 0 : i32
    return %c0_i32, %c0_i32_0 : i32, i32
  }
  func.func @transform_1(%arg0: i32) -> (i32, i32) {
    %c0_i32 = arith.constant 0 : i32
    %c0_i32_0 = arith.constant 0 : i32
    %c0_i32_1 = arith.constant 0 : i32
    return %c0_i32, %c0_i32_0 : i32, i32
  }
}

</mosaic_0001>

<llo_original>
// kernel: tpu_custom_call.1
$region0: #{tpu_custom_call.1}
  #allocation0 [shape = 'u32[]', space=smem, size = 0x4, offset = 0x4, fixed_abs, tag = 'smem constant byte address 0x4 - core index']
  #allocation1 [shape = 'u32[144,128]{1,0:T(1,128)}', space=vmem, size = 0x12000, scoped, tag = 'internal scratch']
  %s0 = inlined_call_operand.hbm [shape: f32[1,8], index: 0, kind: input, shape index: {}]
  %s1 = inlined_call_operand.hbm [shape: f32[1,8], index: 1, kind: output, shape index: {}]
  %s2 = sld [smem:[#allocation0]]
  $region18: #{tpu_custom_call.1} parent=0
    _
  %s4 = ssub.s32 1, %s2
  %s5 = scalar_select 0, %s4, %s2
  $region1: #{tpu_custom_call.1} parent=0
    #allocation2 [shape = 'u8[512]{0}', space=vmem, size = 0x400, scoped, tag = 'input window, operand 0, single buffered']
    #allocation3 [shape = 's32[1]{0}', space=sflag, size = 0x4, scoped, tag = 'scoped memory for tpu_custom_call.1']
    #allocation4 [shape = 's32[1]{0}', space=sflag, size = 0x4, scoped, tag = 'scoped memory for tpu_custom_call.1']
    #allocation5 [shape = 'u8[512]{0}', space=vmem, size = 0x400, scoped, tag = 'output window, operand 0, single buffered']
    %6 = vsyncpa [#allocation3], 0
    %7 = vsyncpa [#allocation4], 0
    // Predicated region
    $region2: #{tpu_custom_call.1} parent=1 // pred_check
      _
    $region3: #{tpu_custom_call.1} parent=1 // pred_check_branch
      %9 = sbr.rel (0) target = $region5
    $region4: #{tpu_custom_call.1} parent=1 // pred_region
      %s11 = ssub.s32 16, 16
      %12 = vsyncadd [#allocation3], %s11
      %s14 = sshll.u32 [#allocation2], 4
      %s15 = int_to_ptr.vmem [resolvable:$true] %s14
      %17 = dma.hbm_to_vmem [thread:$0]  %s0, 16, %s15, [#allocation3]
    $region5: #{tpu_custom_call.1} parent=1 // pred_fallthru
      _
    // Predicated region
    $region6: #{tpu_custom_call.1} parent=1 // pred_check
      _
    $region7: #{tpu_custom_call.1} parent=1 // pred_check_branch
      %19 = sbr.rel (0) target = $region9
    $region8: #{tpu_custom_call.1} parent=1 // pred_region
      %20 = dma.done [#allocation3], 16
    $region9: #{tpu_custom_call.1} parent=1 // pred_fallthru
      _
    %v21 = vld [vmem:[#allocation2] sm:$0x1]
    %v22 = vlaneseq
    %v23 = vand.u32 %v22, 127
    %vm24 = vcmp.lt.s32.totalorder %v23, 8
    %v25 = vsel %vm24, %v21, -inf
    %vm26 = vcmask 1040384
    %v27 = vsel %vm26, %v25, -inf
    %28 = vmax.xlane.f32.xlu0 %v27
    %v29 = vpop.xlane.xlu0 %28
    %v30 = vsub.f32 %v25, %v29
    %v31 = vmul.f32 %v30, 1.442695
    %v32 = vpow.pop %v31
    %v33 = vsel %vm26, %v32, 0.0
    %34 = vadd.xlane.f32.xlu0 %v33
    %v35 = vpop.xlane.xlu0 %34
    %v36 = vrcp.pop %v35
    %v37 = vmul.f32 %v32, %v36
    %38 = vst [vmem:[#allocation5] sm:$0x1] %v37
    // Predicated region
    $region10: #{tpu_custom_call.1} parent=1 // pred_check
      _
    $region11: #{tpu_custom_call.1} parent=1 // pred_check_branch
      %40 = sbr.rel (0) target = $region13
    $region12: #{tpu_custom_call.1} parent=1 // pred_region
      %s42 = ssub.s32 16, 16
      %43 = vsyncadd [#allocation4], %s42
      %s45 = sshll.u32 [#allocation5], 4
      %s46 = int_to_ptr.vmem [resolvable:$true] %s45
      %48 = dma.vmem_to_hbm [thread:$0]  %s46, 16, %s1, [#allocation4]
    $region13: #{tpu_custom_call.1} parent=1 // pred_fallthru
      _
    // Predicated region
    $region14: #{tpu_custom_call.1} parent=1 // pred_check
      _
    $region15: #{tpu_custom_call.1} parent=1 // pred_check_branch
      %50 = sbr.rel (0) target = $region17
    $region16: #{tpu_custom_call.1} parent=1 // pred_region
      %51 = dma.done [#allocation4], 16
    $region17: #{tpu_custom_call.1} parent=1 // pred_fallthru
      _
    %52 = vsyncpa [#allocation3], 1
    %53 = vsyncpa [#allocation4], 1

</llo_original>
